<compile_context>
chip_gen: v7x
topology: tpu7x:2x2x1
jax: 0.10.0
libtpu: 0.0.40
codegen_flags: <defaults>
</compile_context>

<pallas_src>
import functools

import jax
import jax.numpy as jnp
from jax import lax
from jax.experimental import pallas as pl
from jax.experimental.pallas import tpu as pltpu

_LANES = 128
_MIN_BLOCK = 8 * _LANES  # smallest sublane/lane-aligned tile (1024 pixels)


def _bce_kernel(x_ref, t_ref, out_ref, *, total, block_rows):
    """One tile: stable BCE-with-logits, masked, reduced to an (8,128) partial.

    x_ref:   (block_rows, 128) logits tile (native dtype)
    t_ref:   (block_rows, 128) targets tile (native dtype, 0/1 or soft labels)
    out_ref: (1, 8, 128) f32 per-block partial sums
    """
    i = pl.program_id(0)

    x = x_ref[...].astype(jnp.float32)
    y = t_ref[...].astype(jnp.float32)

    # Mask out padded tail elements using the global flat element index.
    rows = lax.broadcasted_iota(jnp.int32, x.shape, 0) + i * block_rows
    lanes = lax.broadcasted_iota(jnp.int32, x.shape, 1)
    flat = rows * _LANES + lanes
    mask = flat < total

    # Numerically stable BCE with logits (same form PyTorch uses).
    loss = jnp.maximum(x, 0.0) - x * y + jnp.log(1.0 + jnp.exp(-jnp.abs(x)))
    loss = jnp.where(mask, loss, 0.0)

    # Fold block_rows sublane rows down to 8 with pure VALU adds (no XLU).
    partial = loss.reshape(block_rows // 8, 8, _LANES).sum(axis=0)
    out_ref[0] = partial


def bce_with_logits_loss(inputs, targets, *, block_pixels=8192):
    """inputs: (N, 1, H, W) logits (any float dtype); targets: (N, 1, H, W)."""
    assert inputs.shape == targets.shape
    P = int(inputs.size)

    # Flatten (free view of contiguous NCHW); keep native dtypes.
    x = inputs.reshape(-1)
    t = targets.reshape(-1)

    # Pick a sublane/lane-aligned tile; shrink for tiny inputs.
    block_pixels = max(_MIN_BLOCK, (block_pixels // _MIN_BLOCK) * _MIN_BLOCK)
    needed = -(-P // _MIN_BLOCK) * _MIN_BLOCK
    block_pixels = min(block_pixels, needed)
    block_rows = block_pixels // _LANES

    # Pad to a whole number of tiles (padded elements are masked in-kernel).
    P_pad = -(-P // block_pixels) * block_pixels
    if P_pad != P:
        x = jnp.pad(x, (0, P_pad - P))
        t = jnp.pad(t, (0, P_pad - P))

    R = P_pad // _LANES
    G = R // block_rows
    x2 = x.reshape(R, _LANES)
    t2 = t.reshape(R, _LANES)

    partials = pl.pallas_call(
        functools.partial(_bce_kernel, total=P, block_rows=block_rows),
        out_shape=jax.ShapeDtypeStruct((G, 8, _LANES), jnp.float32),
        grid_spec=pltpu.PrefetchScalarGridSpec(
            num_scalar_prefetch=0,
            grid=(G,),
            in_specs=[
                pl.BlockSpec((block_rows, _LANES), lambda i: (i, 0)),
                pl.BlockSpec((block_rows, _LANES), lambda i: (i, 0)),
            ],
            out_specs=pl.BlockSpec((1, 8, _LANES), lambda i: (i, 0, 0)),
        ),
        compiler_params=pltpu.CompilerParams(
            dimension_semantics=("parallel",),  # lets both v7x TCs share the grid
        ),
    )(x2, t2)

    # Tiny (G*8*128) final reduction + mean in plain JAX.
    return jnp.sum(partials) / P


def _bce_ref(inputs, targets):
    """Pure-JAX reference matching nn.BCEWithLogitsLoss (mean reduction)."""
    x = jnp.squeeze(inputs, 1).astype(jnp.float32)
    y = jnp.squeeze(targets, 1).astype(jnp.float32)
    loss = jnp.maximum(x, 0.0) - x * y + jnp.log(1.0 + jnp.exp(-jnp.abs(x)))
    return jnp.mean(loss)


if __name__ == "__main__":
    key = jax.random.PRNGKey(0)
    k_x, k_t = jax.random.split(key)
    N, C, H, W = 2, 1, 16, 16  # binary task: single-channel logits
    inputs = jax.random.normal(k_x, (N, C, H, W), dtype=jnp.float32)
    targets = jax.random.bernoulli(k_t, 0.5, (N, C, H, W)).astype(jnp.float32)

    loss = bce_with_logits_loss(inputs, targets)
    jax.block_until_ready(loss)

    ref = _bce_ref(inputs, targets)
    assert jnp.allclose(loss, ref, atol=1e-5, rtol=1e-5), (loss, ref)

    print("KERNEL_OK")
</pallas_src>

<mosaic_0001>
module attributes {stable_mosaic.version = 11 : i64} {
  func.func @_bce_kernel(%arg0: i32, %arg1: memref<8x128xf32, #tpu.memory_space<vmem>>, %arg2: memref<8x128xf32, #tpu.memory_space<vmem>>, %arg3: memref<1x8x128xf32, #tpu.memory_space<vmem>>) attributes {dimension_semantics = [#tpu.dimension_semantics<parallel>], iteration_bounds = array<i64: 1>, scalar_prefetch = 0 : i64, scratch_operands = 0 : i64, tpu.core_type = #tpu.core_type<tc>, window_params = [{transform_indices = @transform_0, window_bounds = array<i64: 8, 128>}, {transform_indices = @transform_1, window_bounds = array<i64: 8, 128>}, {transform_indices = @transform_2, window_bounds = array<i64: 1, 8, 128>}]} {
    %c0 = arith.constant 0 : index
    %c0_0 = arith.constant 0 : index
    %0 = vector.load %arg1[%c0, %c0_0] : memref<8x128xf32, #tpu.memory_space<vmem>>, vector<8x128xf32>
    %c0_1 = arith.constant 0 : index
    %c0_2 = arith.constant 0 : index
    %1 = vector.load %arg2[%c0_1, %c0_2] : memref<8x128xf32, #tpu.memory_space<vmem>>, vector<8x128xf32>
    %2 = tpu.iota {dimensions = array<i32: 0>} : vector<8x128xi32>
    %c8_i32 = arith.constant 8 : i32
    %3 = arith.muli %arg0, %c8_i32 : i32
    %4 = vector.broadcast %3 : i32 to vector<8x128xi32>
    %5 = arith.addi %2, %4 : vector<8x128xi32>
    %6 = tpu.iota {dimensions = array<i32: 1>} : vector<8x128xi32>
    %c128_i32 = arith.constant 128 : i32
    %7 = vector.broadcast %c128_i32 : i32 to vector<8x128xi32>
    %8 = arith.muli %5, %7 : vector<8x128xi32>
    %9 = arith.addi %8, %6 : vector<8x128xi32>
    %c512_i32 = arith.constant 512 : i32
    %10 = vector.broadcast %c512_i32 : i32 to vector<8x128xi32>
    %11 = arith.cmpi slt, %9, %10 : vector<8x128xi32>
    %cst = arith.constant 0.000000e+00 : f32
    %12 = vector.broadcast %cst : f32 to vector<8x128xf32>
    %13 = arith.maximumf %0, %12 : vector<8x128xf32>
    %14 = arith.mulf %0, %1 : vector<8x128xf32>
    %15 = arith.subf %13, %14 : vector<8x128xf32>
    %16 = math.absf %0 : vector<8x128xf32>
    %cst_3 = arith.constant 0.000000e+00 : f32
    %17 = vector.broadcast %cst_3 : f32 to vector<8x128xf32>
    %18 = arith.subf %17, %16 : vector<8x128xf32>
    %19 = math.exp %18 : vector<8x128xf32>
    %cst_4 = arith.constant 1.000000e+00 : f32
    %20 = vector.broadcast %cst_4 : f32 to vector<8x128xf32>
    %21 = arith.addf %20, %19 : vector<8x128xf32>
    %22 = math.log %21 : vector<8x128xf32>
    %23 = arith.addf %15, %22 : vector<8x128xf32>
    %cst_5 = arith.constant 0.000000e+00 : f32
    %24 = vector.broadcast %cst_5 : f32 to vector<8x128xf32>
    %25 = arith.select %11, %23, %24 : vector<8x128xi1>, vector<8x128xf32>
    %26 = vector.shape_cast %25 : vector<8x128xf32> to vector<1x8x128xf32>
    %cst_6 = arith.constant dense<0.000000e+00> : vector<8x128xf32>
    %27 = vector.multi_reduction <add>, %26, %cst_6 [0] : vector<1x8x128xf32> to vector<8x128xf32>
    %c0_7 = arith.constant 0 : index
    %c0_8 = arith.constant 0 : index
    %c0_9 = arith.constant 0 : index
    %28 = vector.load %arg3[%c0_7, %c0_8, %c0_9] : memref<1x8x128xf32, #tpu.memory_space<vmem>>, vector<1x8x128xf32>
    %29 = vector.shape_cast %28 : vector<1x8x128xf32> to vector<8x128xf32>
    %30 = vector.shape_cast %27 : vector<8x128xf32> to vector<1x8x128xf32>
    tpu.vector_store %arg3[%c0_7, %c0_8, %c0_9], %30 {strides = array<i32>} : memref<1x8x128xf32, #tpu.memory_space<vmem>>, vector<1x8x128xf32>,
    return
  }
  func.func @transform_0(%arg0: i32) -> (i32, i32) {
    %c0_i32 = arith.constant 0 : i32
    %c0_i32_0 = arith.constant 0 : i32
    return %arg0, %c0_i32 : i32, i32
  }
  func.func @transform_1(%arg0: i32) -> (i32, i32) {
    %c0_i32 = arith.constant 0 : i32
    %c0_i32_0 = arith.constant 0 : i32
    return %arg0, %c0_i32 : i32, i32
  }
  func.func @transform_2(%arg0: i32) -> (i32, i32, i32) {
    %c0_i32 = arith.constant 0 : i32
    %c0_i32_0 = arith.constant 0 : i32
    %c0_i32_1 = arith.constant 0 : i32
    return %arg0, %c0_i32, %c0_i32_0 : i32, i32, i32
  }
}

</mosaic_0001>

<llo_original>
// kernel: tpu_custom_call.1
$region0: #{tpu_custom_call.1}
  #allocation0 [shape = 'u32[]', space=smem, size = 0x4, offset = 0x4, fixed_abs, tag = 'smem constant byte address 0x4 - core index']
  #allocation1 [shape = 'u32[144,128]{1,0:T(1,128)}', space=vmem, size = 0x12000, scoped, tag = 'internal scratch']
  %s0 = inlined_call_operand.hbm [shape: f32[8,128], index: 0, kind: input, shape index: {}]
  %s1 = inlined_call_operand.hbm [shape: f32[8,128], index: 1, kind: input, shape index: {}]
  %s2 = inlined_call_operand.hbm [shape: f32[1,8,128], index: 2, kind: output, shape index: {}]
  %s3 = sld [smem:[#allocation0]]
  $region26: #{tpu_custom_call.1} parent=0
    _
  %s5 = ssub.s32 1, %s3
  %s6 = scalar_select 0, %s5, %s3
  $region1: #{tpu_custom_call.1} parent=0
    #allocation2 [shape = 'u8[4096]{0}', space=vmem, size = 0x1000, scoped, tag = 'input window, operand 0, single buffered']
    #allocation3 [shape = 's32[1]{0}', space=sflag, size = 0x4, scoped, tag = 'scoped memory for tpu_custom_call.1']
    #allocation4 [shape = 's32[1]{0}', space=sflag, size = 0x4, scoped, tag = 'scoped memory for tpu_custom_call.1']
    #allocation5 [shape = 'u8[4096]{0}', space=vmem, size = 0x1000, scoped, tag = 'input window, operand 1, single buffered']
    #allocation6 [shape = 's32[1]{0}', space=sflag, size = 0x4, scoped, tag = 'scoped memory for tpu_custom_call.1']
    #allocation7 [shape = 'u8[4096]{0}', space=vmem, size = 0x1000, scoped, tag = 'output window, operand 0, single buffered']
    %7 = vsyncpa [#allocation3], 0
    %8 = vsyncpa [#allocation6], 0
    %9 = vsyncpa [#allocation4], 0
    // Predicated region
    $region2: #{tpu_custom_call.1} parent=1 // pred_check
      _
    $region3: #{tpu_custom_call.1} parent=1 // pred_check_branch
      %11 = sbr.rel (0) target = $region5
    $region4: #{tpu_custom_call.1} parent=1 // pred_region
      %s13 = ssub.s32 128, 128
      %14 = vsyncadd [#allocation3], %s13
      %s16 = sshll.u32 [#allocation2], 4
      %s17 = int_to_ptr.vmem [resolvable:$true] %s16
      %19 = dma.hbm_to_vmem [thread:$0]  %s0, 128, %s17, [#allocation3]
    $region5: #{tpu_custom_call.1} parent=1 // pred_fallthru
      _
    // Predicated region
    $region6: #{tpu_custom_call.1} parent=1 // pred_check
      _
    $region7: #{tpu_custom_call.1} parent=1 // pred_check_branch
      %21 = sbr.rel (0) target = $region9
    $region8: #{tpu_custom_call.1} parent=1 // pred_region
      %s23 = ssub.s32 128, 128
      %24 = vsyncadd [#allocation6], %s23
      %s26 = sshll.u32 [#allocation5], 4
      %s27 = int_to_ptr.vmem [resolvable:$true] %s26
      %29 = dma.hbm_to_vmem [thread:$0]  %s1, 128, %s27, [#allocation6]
    $region9: #{tpu_custom_call.1} parent=1 // pred_fallthru
      _
    // Predicated region
    $region10: #{tpu_custom_call.1} parent=1 // pred_check
      _
    $region11: #{tpu_custom_call.1} parent=1 // pred_check_branch
      %31 = sbr.rel (0) target = $region13
    $region12: #{tpu_custom_call.1} parent=1 // pred_region
      %32 = dma.done [#allocation3], 128
    $region13: #{tpu_custom_call.1} parent=1 // pred_fallthru
      _
    // Predicated region
    $region14: #{tpu_custom_call.1} parent=1 // pred_check
      _
    $region15: #{tpu_custom_call.1} parent=1 // pred_check_branch
      %34 = sbr.rel (0) target = $region17
    $region16: #{tpu_custom_call.1} parent=1 // pred_region
      %35 = dma.done [#allocation6], 128
    $region17: #{tpu_custom_call.1} parent=1 // pred_fallthru
      _
    %v36 = vld [vmem:[#allocation2] sm:$0xff]
    %v37 = vld [vmem:[#allocation5] sm:$0xff]
    %v38 = vlaneseq
    %v39 = vshrl.u32 %v38, 7
    %s40 = smul.u32 0, 8
    %v41 = vstv %s40
    %v42 = vadd.s32 %v39, %v41
    %v43 = vlaneseq
    %v44 = vand.u32 %v43, 127
    %v45 = vmul.u32 %v42, 128
    %v46 = vadd.s32 %v45, %v44
    %vm47 = vcmp.lt.s32.totalorder %v46, 512
    %v48 = vmax.f32 %v36, 0.0
    %v49 = vmul.f32 %v36, %v37
    %v50 = vsub.f32 %v48, %v49
    %v51 = vand.u32 2147483647, %v36
    %v52 = vsub.f32 0.0, %v51
    %v53 = vmul.f32 %v52, 1.442695
    %v54 = vpow.pop %v53
    %v55 = vadd.f32 %v54, 1.0
    %v56 = vlog2.pop %v55
    %v57 = vmul.f32 %v56, 0.6931472
    %v58 = vadd.f32 %v50, %v57
    %v59 = vsel %vm47, %v58, 0.0
    %v60 = vadd.f32 %v59, 0.0
    %61 = vst [vmem:[#allocation7] sm:$0xff] %v60
    // Predicated region
    $region18: #{tpu_custom_call.1} parent=1 // pred_check
      _
    $region19: #{tpu_custom_call.1} parent=1 // pred_check_branch
      %63 = sbr.rel (0) target = $region21
    $region20: #{tpu_custom_call.1} parent=1 // pred_region
      %s65 = ssub.s32 128, 128
      %66 = vsyncadd [#allocation4], %s65
      %s68 = sshll.u32 [#allocation7], 4
      %s69 = int_to_ptr.vmem [resolvable:$true] %s68
      %71 = dma.vmem_to_hbm [thread:$0]  %s69, 128, %s2, [#allocation4]
    $region21: #{tpu_custom_call.1} parent=1 // pred_fallthru
      _
    // Predicated region
    $region22: #{tpu_custom_call.1} parent=1 // pred_check
      _
    $region23: #{tpu_custom_call.1} parent=1 // pred_check_branch
      %73 = sbr.rel (0) target = $region25
    $region24: #{tpu_custom_call.1} parent=1 // pred_region
      %74 = dma.done [#allocation4], 128
    $region25: #{tpu_custom_call.1} parent=1 // pred_fallthru
      _
    %75 = vsyncpa [#allocation3], 1
    %76 = vsyncpa [#allocation6], 1
    %77 = vsyncpa [#allocation4], 1

</llo_original>
